<compile_context>
chip_gen: v5e
topology: v5e:2x2
jax: 0.10.0
libtpu: 0.0.40
codegen_flags: <defaults>
</compile_context>

<pallas_src>
import math
import numpy as np
import jax
import jax.numpy as jnp
from jax.experimental import pallas as pl
from jax.experimental.pallas import tpu as pltpu

# ---------------- problem sizes (small, TPU friendly) ----------------
N_NODES  = 32     # number of flow nodes (n)
FEAT     = 64     # feature_size
EMB      = 128    # embedding_size
NUM_CATS = 4      # category rows in flow_char_adj
NUM_PA   = 4      # PA-level rows in flow_char_adj
M_CHAR   = NUM_CATS + NUM_PA
BATCH    = 8      # number of (anomaly, normal) pairs; must be < N_NODES
DROPOUT  = 0.0    # F.dropout(p=0.0, training=True) == identity (deterministic)

VMEM_SPEC = pl.BlockSpec(memory_space=pltpu.MemorySpace.VMEM)


# ---------------------------- fused Pallas kernel ----------------------------
def _iead_fwd_kernel(feat_ref, w_emb_ref, b_emb_ref, char_adj_ref, cat_adj_ref,
                     flow_adj_ref, a_row_ref, w_gc_ref, w_char_ref,
                     item_ids_ref, cat_ids_ref, pa_ids_ref,
                     out_ref):
    f32 = jnp.float32

    # ---- embedding_encode ----
    # flow_emb = feature @ W_emb + b_emb            [n, E]  (kept local; never output)
    flow_emb = jnp.dot(feat_ref[...], w_emb_ref[...],
                       preferred_element_type=f32) + b_emb_ref[...]
    # character_emb = flow_char_adj @ flow_emb      [m, E]  (dense spmm)
    char_emb = jnp.dot(char_adj_ref[...], flow_emb, preferred_element_type=f32)

    # ---- attribute_agg: (flow_emb + flow_cat_adj @ character_emb[:num_cats]) * 0.5 ----
    tem = jnp.dot(cat_adj_ref[...], char_emb[:NUM_CATS, :], preferred_element_type=f32)
    flow_agg = (flow_emb + tem) * 0.5               # [n, E]

    # ---- in-kernel gathers via one-hot MXU matmuls (exact row selection) ----
    item_ids = item_ids_ref[...]                    # [2B, 1] int32 (a-batch then n-batch)
    iota_n = jax.lax.broadcasted_iota(jnp.int32, (2 * BATCH, N_NODES), 1)
    onehot_items = (iota_n == item_ids).astype(f32)                       # [2B, n]
    mask = jnp.dot(onehot_items, flow_adj_ref[...],
                   preferred_element_type=f32) > 0.0                      # flow_adj[ids]
    x_sel = jnp.dot(onehot_items, flow_agg, preferred_element_type=f32)   # flow_agg[ids]

    # ---- GraphAttentionLayer: sparse softmax == masked softmax over adjacency rows ----
    # e_j = flow_agg_j . a   as a_row @ flow_agg^T  -> [1, n] (lane-major)
    e_row = jax.lax.dot_general(a_row_ref[...], flow_agg,
                                (((1,), (1,)), ((), ())),
                                preferred_element_type=f32)               # [1, n]
    scores = jnp.where(mask, e_row, f32(-1e30))
    m = jnp.max(scores, axis=1, keepdims=True)
    p = jnp.where(mask, jnp.exp(scores - m), 0.0)
    denom = jnp.maximum(jnp.sum(p, axis=1, keepdims=True), f32(1e-30))
    attn = p * pl.reciprocal(denom, approx=False)                         # row softmax
    x_agg = jnp.dot(attn, flow_agg, preferred_element_type=f32)           # [2B, E]

    # flow_GraphAttention: tanh(cat([x_sel, x_agg]) @ W_gc) split into two matmuls
    flow_latent = jnp.tanh(
        jnp.dot(x_sel, w_gc_ref[:EMB, :], preferred_element_type=f32)
        + jnp.dot(x_agg, w_gc_ref[EMB:, :], preferred_element_type=f32))  # [2B, E]

    # ---- character_modeling: all four (category, PA) combos batched ----
    cat_ids = cat_ids_ref[...]                      # [4B, 1] int32
    pa_ids = pa_ids_ref[...]                        # [4B, 1] int32
    iota_m = jax.lax.broadcasted_iota(jnp.int32, (4 * BATCH, M_CHAR), 1)
    onehot_cats = (iota_m == cat_ids).astype(f32)
    onehot_pas = (iota_m == pa_ids).astype(f32)
    cat_sel = jnp.dot(onehot_cats, char_emb, preferred_element_type=f32)  # [4B, E]
    pa_sel = jnp.dot(onehot_pas, char_emb, preferred_element_type=f32)    # [4B, E]
    char_latent = jax.nn.sigmoid(
        jnp.dot(cat_sel, w_char_ref[:EMB, :], preferred_element_type=f32)
        + jnp.dot(pa_sel, w_char_ref[EMB:, :], preferred_element_type=f32))  # [4B, E]

    # ---- decode_score: cosine similarity for all 4 prediction vectors at once ----
    # char_latent row blocks: [aa, nn, na, an]; flow blocks tiled as [a, n, a, n]
    flow_big = jnp.concatenate([flow_latent, flow_latent], axis=0)        # [4B, E]
    num = jnp.sum(char_latent * flow_big, axis=1, keepdims=True)
    sa = jnp.sum(char_latent * char_latent, axis=1, keepdims=True)
    sb = jnp.sum(flow_big * flow_big, axis=1, keepdims=True)
    # == num / max(|a|*|b|, 1e-8) for the non-degenerate norms seen here
    out_ref[...] = num * jax.lax.rsqrt(jnp.maximum(sa * sb, f32(1e-16)))  # [4B, 1]


# ---------------------------- IEAD.forward wrapper ----------------------------
def iead_forward(params, feature, flow_adj, flow_char_adj, item_id, category, PA_level):
    # glue: flow_cat_adj = flow_char_adj.to_dense()[:num_cats].T   (tiny [n, num_cats])
    cat_adj = flow_char_adj[:NUM_CATS, :].T

    # index vectors for in-kernel one-hot gathers
    item_ids = jnp.concatenate([item_id[:, 0], item_id[:, 1]]).astype(jnp.int32).reshape(-1, 1)
    # char combos ordered to line up with flow blocks [a, n, a, n]: (aa, nn, na, an)
    cat_ids = jnp.concatenate([category[:, 0], category[:, 1],
                               category[:, 1], category[:, 0]]).astype(jnp.int32).reshape(-1, 1)
    pa_ids = jnp.concatenate([PA_level[:, 0], PA_level[:, 1],
                              PA_level[:, 0], PA_level[:, 1]]).astype(jnp.int32).reshape(-1, 1)

    preds = pl.pallas_call(
        _iead_fwd_kernel,
        out_shape=jax.ShapeDtypeStruct((4 * BATCH, 1), jnp.float32),
        in_specs=[VMEM_SPEC] * 12,
        out_specs=VMEM_SPEC,
    )(feature, params["weight_emb"], params["bias_emb"].reshape(1, -1),
      flow_char_adj, cat_adj, flow_adj,
      params["gat_a_row"], params["weight_gc"], params["weight_character"],
      item_ids, cat_ids, pa_ids)

    preds = preds.reshape(4, BATCH)        # rows: [pred_a_p, pred_n_p, pred_a_n, pred_n_n]
    return preds[0], preds[2], preds[1], preds[3]


# ---------------------------- pure-JAX reference ----------------------------
def reference_forward(params, feature, flow_adj, flow_char_adj, item_id, category, PA_level):
    P = jax.lax.Precision.HIGHEST
    flow_emb = jnp.dot(feature, params["weight_emb"], precision=P) + params["bias_emb"]
    char_emb = jnp.dot(flow_char_adj, flow_emb, precision=P)
    cat_adj = flow_char_adj[:NUM_CATS].T
    tem = jnp.dot(cat_adj, char_emb[:NUM_CATS], precision=P)
    flow_agg = (flow_emb + tem) * 0.5
    a_col = params["gat_a_row"].reshape(-1, 1)

    def flow_modeling(ids):
        mask = flow_adj[ids] > 0
        e = jnp.dot(flow_agg, a_col, precision=P)[:, 0]
        scores = jnp.where(mask, e[None, :], -jnp.inf)
        attn = jax.nn.softmax(scores, axis=1)
        x_agg = jnp.dot(attn, flow_agg, precision=P)
        h = jnp.concatenate([flow_agg[ids], x_agg], axis=1)
        return jnp.tanh(jnp.dot(h, params["weight_gc"], precision=P))

    def char_modeling(cats, pas):
        h = jnp.concatenate([char_emb[cats], char_emb[pas]], axis=1)
        return jax.nn.sigmoid(jnp.dot(h, params["weight_character"], precision=P))

    def cos(a, b):
        num = jnp.sum(a * b, axis=1)
        den = jnp.maximum(jnp.linalg.norm(a, axis=1) * jnp.linalg.norm(b, axis=1), 1e-8)
        return num / den

    fa = flow_modeling(item_id[:, 0])
    fn = flow_modeling(item_id[:, 1])
    caa = char_modeling(category[:, 0], PA_level[:, 0])
    cna = char_modeling(category[:, 1], PA_level[:, 0])
    cnn = char_modeling(category[:, 1], PA_level[:, 1])
    can = char_modeling(category[:, 0], PA_level[:, 1])
    return cos(caa, fa), cos(cna, fa), cos(cnn, fn), cos(can, fn)


# ---------------------------- setup & run ----------------------------
def make_params(key):
    ks = jax.random.split(key, 5)
    stdv = 1.0 / math.sqrt(EMB)
    gain = 1.414
    bound = gain * math.sqrt(6.0 / (EMB + 1))   # xavier_uniform_ on (EMB, 1)
    return {
        "weight_emb": jax.random.uniform(ks[0], (FEAT, EMB), jnp.float32, -stdv, stdv),
        "bias_emb": jax.random.uniform(ks[1], (EMB,), jnp.float32, -stdv, stdv),
        "weight_character": jax.random.uniform(ks[2], (2 * EMB, EMB), jnp.float32, -stdv, stdv),
        # GAT attention vector stored pre-transposed as [1, EMB] (layout glue)
        "gat_a_row": jax.random.uniform(ks[3], (1, EMB), jnp.float32, -bound, bound),
        "weight_gc": jax.random.uniform(ks[4], (2 * EMB, EMB), jnp.float32, -stdv, stdv),
    }


if __name__ == "__main__":
    key = jax.random.PRNGKey(0)
    kp, kf, ka, kc, kpa, ki, kcat, kpl = jax.random.split(key, 8)

    params = make_params(kp)

    feature = jax.random.normal(kf, (N_NODES, FEAT), jnp.float32)

    # dense 0/1 flow adjacency with self-loops (every row has >=1 neighbor)
    flow_adj = (jax.random.uniform(ka, (N_NODES, N_NODES)) < 0.2).astype(jnp.float32)
    flow_adj = jnp.maximum(flow_adj, jnp.eye(N_NODES, dtype=jnp.float32))

    # dense flow_char_adj: [num_cats + num_PA, n]; each node has 1 category + 1 PA level
    cat_assign = jax.random.randint(kc, (N_NODES,), 0, NUM_CATS)
    pa_assign = jax.random.randint(kpa, (N_NODES,), 0, NUM_PA)
    flow_char_adj = jnp.concatenate(
        [jax.nn.one_hot(cat_assign, NUM_CATS, dtype=jnp.float32).T,
         jax.nn.one_hot(pa_assign, NUM_PA, dtype=jnp.float32).T], axis=0)  # [M_CHAR, n]

    item_id = jax.random.randint(ki, (BATCH, 2), 0, N_NODES)
    category = jax.random.randint(kcat, (BATCH, 2), 0, NUM_CATS)
    PA_level = jax.random.randint(kpl, (BATCH, 2), NUM_CATS, M_CHAR)

    forward = jax.jit(iead_forward)
    outs = forward(params, feature, flow_adj, flow_char_adj, item_id, category, PA_level)
    outs = jax.block_until_ready(outs)

    refs = reference_forward(params, feature, flow_adj, flow_char_adj, item_id, category, PA_level)
    refs = jax.block_until_ready(refs)

    for o, r in zip(outs, refs):
        assert o.shape == (BATCH,)
        np.testing.assert_allclose(np.asarray(o), np.asarray(r), rtol=1e-2, atol=2e-3)

    print("KERNEL_OK")
</pallas_src>

<mosaic_0001>
module attributes {stable_mosaic.version = 11 : i64} {
  func.func @_iead_fwd_kernel(%arg0: memref<32x64xf32, #tpu.memory_space<vmem>>, %arg1: memref<64x128xf32, #tpu.memory_space<vmem>>, %arg2: memref<1x128xf32, #tpu.memory_space<vmem>>, %arg3: memref<8x32xf32, #tpu.memory_space<vmem>>, %arg4: memref<32x4xf32, #tpu.memory_space<vmem>>, %arg5: memref<32x32xf32, #tpu.memory_space<vmem>>, %arg6: memref<1x128xf32, #tpu.memory_space<vmem>>, %arg7: memref<256x128xf32, #tpu.memory_space<vmem>>, %arg8: memref<256x128xf32, #tpu.memory_space<vmem>>, %arg9: memref<16x1xi32, #tpu.memory_space<vmem>>, %arg10: memref<32x1xi32, #tpu.memory_space<vmem>>, %arg11: memref<32x1xi32, #tpu.memory_space<vmem>>, %arg12: memref<32x1xf32, #tpu.memory_space<vmem>>) attributes {dimension_semantics = [], scalar_prefetch = 0 : i64, scratch_operands = 0 : i64, tpu.core_type = #tpu.core_type<tc>} {
    %c0 = arith.constant 0 : index
    %c0_0 = arith.constant 0 : index
    %0 = vector.load %arg0[%c0, %c0_0] : memref<32x64xf32, #tpu.memory_space<vmem>>, vector<32x64xf32>
    %c0_1 = arith.constant 0 : index
    %c0_2 = arith.constant 0 : index
    %1 = vector.load %arg1[%c0_1, %c0_2] : memref<64x128xf32, #tpu.memory_space<vmem>>, vector<64x128xf32>
    %cst = arith.constant dense<0.000000e+00> : vector<32x128xf32>
    %2 = tpu.matmul %0, %1, %cst {dimension_numbers = #tpu.dot_dimension_numbers<[1], [0], [0], [1], [0, 0, 1, 1], [], []>} : vector<32x64xf32>, vector<64x128xf32>, vector<32x128xf32> -> vector<32x128xf32>
    %c0_3 = arith.constant 0 : index
    %c0_4 = arith.constant 0 : index
    %3 = vector.load %arg2[%c0_3, %c0_4] : memref<1x128xf32, #tpu.memory_space<vmem>>, vector<1x128xf32>
    %4 = vector.broadcast %3 : vector<1x128xf32> to vector<32x128xf32>
    %5 = arith.addf %2, %4 : vector<32x128xf32>
    %c0_5 = arith.constant 0 : index
    %c0_6 = arith.constant 0 : index
    %6 = vector.load %arg3[%c0_5, %c0_6] : memref<8x32xf32, #tpu.memory_space<vmem>>, vector<8x32xf32>
    %cst_7 = arith.constant dense<0.000000e+00> : vector<8x128xf32>
    %7 = tpu.matmul %6, %5, %cst_7 {dimension_numbers = #tpu.dot_dimension_numbers<[1], [0], [0], [1], [0, 0, 1, 1], [], []>} : vector<8x32xf32>, vector<32x128xf32>, vector<8x128xf32> -> vector<8x128xf32>
    %c0_8 = arith.constant 0 : index
    %c0_9 = arith.constant 0 : index
    %8 = vector.load %arg4[%c0_8, %c0_9] : memref<32x4xf32, #tpu.memory_space<vmem>>, vector<32x4xf32>
    %9 = vector.extract_strided_slice %7 {offsets = [0, 0], sizes = [4, 128], strides = [1, 1]} : vector<8x128xf32> to vector<4x128xf32>
    %cst_10 = arith.constant dense<0.000000e+00> : vector<32x128xf32>
    %10 = tpu.matmul %8, %9, %cst_10 {dimension_numbers = #tpu.dot_dimension_numbers<[1], [0], [0], [1], [0, 0, 1, 1], [], []>} : vector<32x4xf32>, vector<4x128xf32>, vector<32x128xf32> -> vector<32x128xf32>
    %11 = arith.addf %5, %10 : vector<32x128xf32>
    %cst_11 = arith.constant 5.000000e-01 : f32
    %12 = vector.broadcast %cst_11 : f32 to vector<32x128xf32>
    %13 = arith.mulf %11, %12 : vector<32x128xf32>
    %c0_12 = arith.constant 0 : index
    %c0_13 = arith.constant 0 : index
    %14 = vector.load %arg9[%c0_12, %c0_13] : memref<16x1xi32, #tpu.memory_space<vmem>>, vector<16x1xi32>
    %15 = tpu.iota {dimensions = array<i32: 1>} : vector<16x32xi32>
    %16 = vector.broadcast %14 : vector<16x1xi32> to vector<16x32xi32>
    %17 = arith.cmpi eq, %15, %16 : vector<16x32xi32>
    %18 = arith.extui %17 : vector<16x32xi1> to vector<16x32xi32>
    %19 = arith.sitofp %18 : vector<16x32xi32> to vector<16x32xf32>
    %c0_14 = arith.constant 0 : index
    %c0_15 = arith.constant 0 : index
    %20 = vector.load %arg5[%c0_14, %c0_15] : memref<32x32xf32, #tpu.memory_space<vmem>>, vector<32x32xf32>
    %cst_16 = arith.constant dense<0.000000e+00> : vector<16x32xf32>
    %21 = tpu.matmul %19, %20, %cst_16 {dimension_numbers = #tpu.dot_dimension_numbers<[1], [0], [0], [1], [0, 0, 1, 1], [], []>} : vector<16x32xf32>, vector<32x32xf32>, vector<16x32xf32> -> vector<16x32xf32>
    %cst_17 = arith.constant 0.000000e+00 : f32
    %22 = vector.broadcast %cst_17 : f32 to vector<16x32xf32>
    %23 = arith.cmpf ogt, %21, %22 : vector<16x32xf32>
    %cst_18 = arith.constant dense<0.000000e+00> : vector<16x128xf32>
    %24 = tpu.matmul %19, %13, %cst_18 {dimension_numbers = #tpu.dot_dimension_numbers<[1], [0], [0], [1], [0, 0, 1, 1], [], []>} : vector<16x32xf32>, vector<32x128xf32>, vector<16x128xf32> -> vector<16x128xf32>
    %c0_19 = arith.constant 0 : index
    %c0_20 = arith.constant 0 : index
    %25 = vector.load %arg6[%c0_19, %c0_20] : memref<1x128xf32, #tpu.memory_space<vmem>>, vector<1x128xf32>
    %cst_21 = arith.constant dense<0.000000e+00> : vector<1x32xf32>
    %26 = tpu.matmul %25, %13, %cst_21 {dimension_numbers = #tpu.dot_dimension_numbers<[1], [1], [0], [0], [0, 0, 1, 0], [], []>} : vector<1x128xf32>, vector<32x128xf32>, vector<1x32xf32> -> vector<1x32xf32>
    %cst_22 = arith.constant -1.000000e+30 : f32
    %27 = vector.shape_cast %26 : vector<1x32xf32> to vector<1x32xf32>
    %28 = vector.broadcast %27 : vector<1x32xf32> to vector<16x32xf32>
    %29 = vector.broadcast %cst_22 : f32 to vector<16x32xf32>
    %30 = arith.select %23, %28, %29 : vector<16x32xi1>, vector<16x32xf32>
    %cst_23 = arith.constant dense<0xFF800000> : vector<16xf32>
    %31 = vector.multi_reduction <maximumf>, %30, %cst_23 [1] : vector<16x32xf32> to vector<16xf32>
    %32 = vector.shape_cast %31 : vector<16xf32> to vector<16x1xf32>
    %33 = vector.broadcast %32 : vector<16x1xf32> to vector<16x32xf32>
    %34 = arith.subf %30, %33 : vector<16x32xf32>
    %35 = math.exp %34 : vector<16x32xf32>
    %cst_24 = arith.constant 0.000000e+00 : f32
    %36 = vector.broadcast %cst_24 : f32 to vector<16x32xf32>
    %37 = arith.select %23, %35, %36 : vector<16x32xi1>, vector<16x32xf32>
    %cst_25 = arith.constant dense<0.000000e+00> : vector<16xf32>
    %38 = vector.multi_reduction <add>, %37, %cst_25 [1] : vector<16x32xf32> to vector<16xf32>
    %39 = vector.shape_cast %38 : vector<16xf32> to vector<16x1xf32>
    %cst_26 = arith.constant 1.000000e-30 : f32
    %40 = vector.broadcast %cst_26 : f32 to vector<16x1xf32>
    %41 = arith.maximumf %39, %40 : vector<16x1xf32>
    %42 = tpu.reciprocal %41 : vector<16x1xf32> -> vector<16x1xf32>
    %43 = vector.broadcast %42 : vector<16x1xf32> to vector<16x32xf32>
    %44 = arith.mulf %37, %43 : vector<16x32xf32>
    %cst_27 = arith.constant dense<0.000000e+00> : vector<16x128xf32>
    %45 = tpu.matmul %44, %13, %cst_27 {dimension_numbers = #tpu.dot_dimension_numbers<[1], [0], [0], [1], [0, 0, 1, 1], [], []>} : vector<16x32xf32>, vector<32x128xf32>, vector<16x128xf32> -> vector<16x128xf32>
    %c0_28 = arith.constant 0 : index
    %c0_29 = arith.constant 0 : index
    %46 = vector.load %arg7[%c0_28, %c0_29] : memref<256x128xf32, #tpu.memory_space<vmem>>, vector<128x128xf32>
    %cst_30 = arith.constant dense<0.000000e+00> : vector<16x128xf32>
    %47 = tpu.matmul %24, %46, %cst_30 {dimension_numbers = #tpu.dot_dimension_numbers<[1], [0], [0], [1], [0, 0, 1, 1], [], []>} : vector<16x128xf32>, vector<128x128xf32>, vector<16x128xf32> -> vector<16x128xf32>
    %c128 = arith.constant 128 : index
    %c0_31 = arith.constant 0 : index
    %48 = vector.load %arg7[%c128, %c0_31] : memref<256x128xf32, #tpu.memory_space<vmem>>, vector<128x128xf32>
    %cst_32 = arith.constant dense<0.000000e+00> : vector<16x128xf32>
    %49 = tpu.matmul %45, %48, %cst_32 {dimension_numbers = #tpu.dot_dimension_numbers<[1], [0], [0], [1], [0, 0, 1, 1], [], []>} : vector<16x128xf32>, vector<128x128xf32>, vector<16x128xf32> -> vector<16x128xf32>
    %50 = arith.addf %47, %49 : vector<16x128xf32>
    %51 = math.tanh %50 : vector<16x128xf32>
    %c0_33 = arith.constant 0 : index
    %c0_34 = arith.constant 0 : index
    %52 = vector.load %arg10[%c0_33, %c0_34] : memref<32x1xi32, #tpu.memory_space<vmem>>, vector<32x1xi32>
    %c0_35 = arith.constant 0 : index
    %c0_36 = arith.constant 0 : index
    %53 = vector.load %arg11[%c0_35, %c0_36] : memref<32x1xi32, #tpu.memory_space<vmem>>, vector<32x1xi32>
    %54 = tpu.iota {dimensions = array<i32: 1>} : vector<32x8xi32>
    %55 = vector.broadcast %52 : vector<32x1xi32> to vector<32x8xi32>
    %56 = arith.cmpi eq, %54, %55 : vector<32x8xi32>
    %57 = arith.extui %56 : vector<32x8xi1> to vector<32x8xi32>
    %58 = arith.sitofp %57 : vector<32x8xi32> to vector<32x8xf32>
    %59 = vector.broadcast %53 : vector<32x1xi32> to vector<32x8xi32>
    %60 = arith.cmpi eq, %54, %59 : vector<32x8xi32>
    %61 = arith.extui %60 : vector<32x8xi1> to vector<32x8xi32>
    %62 = arith.sitofp %61 : vector<32x8xi32> to vector<32x8xf32>
    %cst_37 = arith.constant dense<0.000000e+00> : vector<32x128xf32>
    %63 = tpu.matmul %58, %7, %cst_37 {dimension_numbers = #tpu.dot_dimension_numbers<[1], [0], [0], [1], [0, 0, 1, 1], [], []>} : vector<32x8xf32>, vector<8x128xf32>, vector<32x128xf32> -> vector<32x128xf32>
    %cst_38 = arith.constant dense<0.000000e+00> : vector<32x128xf32>
    %64 = tpu.matmul %62, %7, %cst_38 {dimension_numbers = #tpu.dot_dimension_numbers<[1], [0], [0], [1], [0, 0, 1, 1], [], []>} : vector<32x8xf32>, vector<8x128xf32>, vector<32x128xf32> -> vector<32x128xf32>
    %c0_39 = arith.constant 0 : index
    %c0_40 = arith.constant 0 : index
    %65 = vector.load %arg8[%c0_39, %c0_40] : memref<256x128xf32, #tpu.memory_space<vmem>>, vector<128x128xf32>
    %cst_41 = arith.constant dense<0.000000e+00> : vector<32x128xf32>
    %66 = tpu.matmul %63, %65, %cst_41 {dimension_numbers = #tpu.dot_dimension_numbers<[1], [0], [0], [1], [0, 0, 1, 1], [], []>} : vector<32x128xf32>, vector<128x128xf32>, vector<32x128xf32> -> vector<32x128xf32>
    %c128_42 = arith.constant 128 : index
    %c0_43 = arith.constant 0 : index
    %67 = vector.load %arg8[%c128_42, %c0_43] : memref<256x128xf32, #tpu.memory_space<vmem>>, vector<128x128xf32>
    %cst_44 = arith.constant dense<0.000000e+00> : vector<32x128xf32>
    %68 = tpu.matmul %64, %67, %cst_44 {dimension_numbers = #tpu.dot_dimension_numbers<[1], [0], [0], [1], [0, 0, 1, 1], [], []>} : vector<32x128xf32>, vector<128x128xf32>, vector<32x128xf32> -> vector<32x128xf32>
    %69 = arith.addf %66, %68 : vector<32x128xf32>
    %70 = arith.negf %69 : vector<32x128xf32>
    %71 = math.exp %70 : vector<32x128xf32>
    %cst_45 = arith.constant 1.000000e+00 : f32
    %72 = vector.broadcast %cst_45 : f32 to vector<32x128xf32>
    %73 = arith.addf %72, %71 : vector<32x128xf32>
    %74 = arith.divf %72, %73 : vector<32x128xf32>
    %75 = tpu.concatenate %51, %51 in 0 : vector<16x128xf32>, vector<16x128xf32> -> vector<32x128xf32>
    %76 = arith.mulf %74, %75 : vector<32x128xf32>
    %cst_46 = arith.constant dense<0.000000e+00> : vector<32xf32>
    %77 = vector.multi_reduction <add>, %76, %cst_46 [1] : vector<32x128xf32> to vector<32xf32>
    %78 = vector.shape_cast %77 : vector<32xf32> to vector<32x1xf32>
    %79 = arith.mulf %74, %74 : vector<32x128xf32>
    %cst_47 = arith.constant dense<0.000000e+00> : vector<32xf32>
    %80 = vector.multi_reduction <add>, %79, %cst_47 [1] : vector<32x128xf32> to vector<32xf32>
    %81 = vector.shape_cast %80 : vector<32xf32> to vector<32x1xf32>
    %82 = arith.mulf %75, %75 : vector<32x128xf32>
    %cst_48 = arith.constant dense<0.000000e+00> : vector<32xf32>
    %83 = vector.multi_reduction <add>, %82, %cst_48 [1] : vector<32x128xf32> to vector<32xf32>
    %84 = vector.shape_cast %83 : vector<32xf32> to vector<32x1xf32>
    %85 = arith.mulf %81, %84 : vector<32x1xf32>
    %cst_49 = arith.constant 1.000000e-16 : f32
    %86 = vector.broadcast %cst_49 : f32 to vector<32x1xf32>
    %87 = arith.maximumf %85, %86 : vector<32x1xf32>
    %88 = math.rsqrt %87 : vector<32x1xf32>
    %89 = arith.mulf %78, %88 : vector<32x1xf32>
    %c0_50 = arith.constant 0 : index
    %c0_51 = arith.constant 0 : index
    %90 = vector.load %arg12[%c0_50, %c0_51] : memref<32x1xf32, #tpu.memory_space<vmem>>, vector<32x1xf32>
    tpu.vector_store %arg12[%c0_50, %c0_51], %89 {strides = array<i32>} : memref<32x1xf32, #tpu.memory_space<vmem>>, vector<32x1xf32>,
    return
  }
}

</mosaic_0001>

<llo_original>
// kernel: iead_forward.1
$region0: #{iead_forward.1}
  #allocation0 [shape = 'u32[]', space=smem, size = 0x4, offset = 0x4, fixed_abs, tag = 'smem constant byte address 0x4 - core index']
  #allocation1 [shape = 'u32[72,128]{1,0:T(1,128)}', space=vmem, size = 0x9000, scoped, tag = 'internal scratch']
  %s0 = inlined_call_operand.vmem [shape: f32[32,64], index: 0, kind: input, shape index: {}]
  %s1 = inlined_call_operand.vmem [shape: f32[64,128], index: 1, kind: input, shape index: {}]
  %s2 = inlined_call_operand.vmem [shape: f32[1,128], index: 2, kind: input, shape index: {}]
  %s3 = inlined_call_operand.vmem [shape: f32[8,32], index: 3, kind: input, shape index: {}]
  %s4 = inlined_call_operand.vmem [shape: f32[32,4], index: 4, kind: input, shape index: {}]
  %s5 = inlined_call_operand.hbm [shape: f32[32,32], index: 5, kind: input, shape index: {}]
  %s6 = inlined_call_operand.vmem [shape: f32[1,128], index: 6, kind: input, shape index: {}]
  %s7 = inlined_call_operand.hbm [shape: f32[256,128], index: 7, kind: input, shape index: {}]
  %s8 = inlined_call_operand.hbm [shape: f32[256,128], index: 8, kind: input, shape index: {}]
  %s9 = inlined_call_operand.vmem [shape: s32[16,1], index: 9, kind: input, shape index: {}]
  %s10 = inlined_call_operand.vmem [shape: s32[32,1], index: 10, kind: input, shape index: {}]
  %s11 = inlined_call_operand.vmem [shape: s32[32,1], index: 11, kind: input, shape index: {}]
  %s12 = inlined_call_operand.vmem [shape: f32[32,1], index: 12, kind: output, shape index: {}]
  %s13 = sld [smem:[#allocation0]]
  $region70: #{iead_forward.1} parent=0
    _
  %s15 = ssub.s32 1, %s13
  %s16 = scalar_select 0, %s15, %s13
  $region1: #{iead_forward.1} parent=0
    #allocation2 [shape = 'u8[16384]{0}', space=vmem, size = 0x4000, scoped, tag = 'input window, operand 5, single buffered']
    #allocation3 [shape = 's32[1]{0}', space=sflag, size = 0x4, scoped, tag = 'scoped memory for iead_forward.1']
    #allocation4 [shape = 'u8[131072]{0}', space=vmem, size = 0x20000, scoped, tag = 'input window, operand 7, single buffered']
    #allocation5 [shape = 's32[1]{0}', space=sflag, size = 0x4, scoped, tag = 'scoped memory for iead_forward.1']
    #allocation6 [shape = 'u8[131072]{0}', space=vmem, size = 0x20000, scoped, tag = 'input window, operand 8, single buffered']
    %17 = vsyncpa [#allocation3], 0
    %18 = vsyncpa [#allocation5], 0
    // Predicated region
    $region2: #{iead_forward.1} parent=1 // pred_check
      _
    $region3: #{iead_forward.1} parent=1 // pred_check_branch
      %20 = sbr.rel (0) target = $region5
    $region4: #{iead_forward.1} parent=1 // pred_region
      _
    $region5: #{iead_forward.1} parent=1 // pred_fallthru
      _
    // Predicated region
    $region6: #{iead_forward.1} parent=1 // pred_check
      _
    $region7: #{iead_forward.1} parent=1 // pred_check_branch
      %22 = sbr.rel (0) target = $region9
    $region8: #{iead_forward.1} parent=1 // pred_region
      _
    $region9: #{iead_forward.1} parent=1 // pred_fallthru
      _
    // Predicated region
    $region10: #{iead_forward.1} parent=1 // pred_check
      _
    $region11: #{iead_forward.1} parent=1 // pred_check_branch
      %24 = sbr.rel (0) target = $region13
    $region12: #{iead_forward.1} parent=1 // pred_region
      _
    $region13: #{iead_forward.1} parent=1 // pred_fallthru
      _
    // Predicated region
    $region14: #{iead_forward.1} parent=1 // pred_check
      _
    $region15: #{iead_forward.1} parent=1 // pred_check_branch
      %26 = sbr.rel (0) target = $region17
    $region16: #{iead_forward.1} parent=1 // pred_region
      _
    $region17: #{iead_forward.1} parent=1 // pred_fallthru
      _
    // Predicated region
    $region18: #{iead_forward.1} parent=1 // pred_check
      _
    $region19: #{iead_forward.1} parent=1 // pred_check_branch
      %28 = sbr.rel (0) target = $region21
    $region20: #{iead_forward.1} parent=1 // pred_region
      _
    $region21: #{iead_forward.1} parent=1 // pred_fallthru
      _
    // Predicated region
    $region22: #{iead_forward.1} parent=1 // pred_check
      _
    $region23: #{iead_forward.1} parent=1 // pred_check_branch
      %30 = sbr.rel (0) target = $region25
    $region24: #{iead_forward.1} parent=1 // pred_region
      %32 = vsyncadd [#allocation3], 0
      %s33 = sshll.u32 %s5, 4
      %s34 = int_to_ptr.hbm [resolvable:$true] %s33
      %s35 = sshll.u32 [#allocation2], 4
      %s36 = int_to_ptr.vmem [resolvable:$true] %s35
      %41 = dma.hbm_to_vmem [thread:$0]  %s34, 512, %s36, [#allocation3], 128, 128, 8
    $region25: #{iead_forward.1} parent=1 // pred_fallthru
      _
    // Predicated region
    $region26: #{iead_forward.1} parent=1 // pred_check
      _
    $region27: #{iead_forward.1} parent=1 // pred_check_branch
      %43 = sbr.rel (0) target = $region29
    $region28: #{iead_forward.1} parent=1 // pred_region
      _
    $region29: #{iead_forward.1} parent=1 // pred_fallthru
      _
    // Predicated region
    $region30: #{iead_forward.1} parent=1 // pred_check
      _
    $region31: #{iead_forward.1} parent=1 // pred_check_branch
      %45 = sbr.rel (0) target = $region33
    $region32: #{iead_forward.1} parent=1 // pred_region
      %47 = vsyncadd [#allocation5], 0
      %s48 = sshll.u32 %s7, 4
      %s49 = int_to_ptr.hbm [resolvable:$true] %s48
      %s50 = sshll.u32 [#allocation4], 4
      %s51 = int_to_ptr.vmem [resolvable:$true] %s50
      %56 = dma.hbm_to_vmem [thread:$0]  %s49, 4096, %s51, [#allocation5], 128, 128, 8
    $region33: #{iead_forward.1} parent=1 // pred_fallthru
      _
    // Predicated region
    $region34: #{iead_forward.1} parent=1 // pred_check
      _
    $region35: #{iead_forward.1} parent=1 // pred_check_branch
      %58 = sbr.rel (0) target = $region37
    $region36: #{iead_forward.1} parent=1 // pred_region
      %60 = vsyncadd [#allocation5], 0
      %s61 = sshll.u32 %s8, 4
      %s62 = int_to_ptr.hbm [resolvable:$true] %s61
      %s63 = sshll.u32 [#allocation6], 4
      %s64 = int_to_ptr.vmem [resolvable:$true] %s63
      %69 = dma.hbm_to_vmem [thread:$0]  %s62, 4096, %s64, [#allocation5], 128, 128, 8
    $region37: #{iead_forward.1} parent=1 // pred_fallthru
      _
    // Predicated region
    $region38: #{iead_forward.1} parent=1 // pred_check
      _
    $region39: #{iead_forward.1} parent=1 // pred_check_branch
      %71 = sbr.rel (0) target = $region41
    $region40: #{iead_forward.1} parent=1 // pred_region
      _
    $region41: #{iead_forward.1} parent=1 // pred_fallthru
      _
    // Predicated region
    $region42: #{iead_forward.1} parent=1 // pred_check
      _
    $region43: #{iead_forward.1} parent=1 // pred_check_branch
      %73 = sbr.rel (0) target = $region45
    $region44: #{iead_forward.1} parent=1 // pred_region
      _
    $region45: #{iead_forward.1} parent=1 // pred_fallthru
      _
    // Predicated region
    $region46: #{iead_forward.1} parent=1 // pred_check
      _
    $region47: #{iead_forward.1} parent=1 // pred_check_branch
      %75 = sbr.rel (0) target = $region49
    $region48: #{iead_forward.1} parent=1 // pred_region
      _
    $region49: #{iead_forward.1} parent=1 // pred_fallthru
      _
    // Predicated region
    $region50: #{iead_forward.1} parent=1 // pred_check
      _
    $region51: #{iead_forward.1} parent=1 // pred_check_branch
      %77 = sbr.rel (0) target = $region53
    $region52: #{iead_forward.1} parent=1 // pred_region
      %79 = dma.done [#allocation3], 512
    $region53: #{iead_forward.1} parent=1 // pred_fallthru
      _
    // Predicated region
    $region54: #{iead_forward.1} parent=1 // pred_check
      _
    $region55: #{iead_forward.1} parent=1 // pred_check_branch
      %81 = sbr.rel (0) target = $region57
    $region56: #{iead_forward.1} parent=1 // pred_region
      %83 = dma.done [#allocation5], 4096
    $region57: #{iead_forward.1} parent=1 // pred_fallthru
      _
    // Predicated region
    $region58: #{iead_forward.1} parent=1 // pred_check
      _
    $region59: #{iead_forward.1} parent=1 // pred_check_branch
      %85 = sbr.rel (0) target = $region61
    $region60: #{iead_forward.1} parent=1 // pred_region
      %87 = dma.done [#allocation5], 4096
    $region61: #{iead_forward.1} parent=1 // pred_fallthru
      _
    %v88 = vld [vmem:[%s0] sm:$0xff]
    %v89 = vld [vmem:[%s0 + $0x8] sm:$0xff]
    %v90 = vld [vmem:[%s0 + $0x10] sm:$0xff]
    %v91 = vld [vmem:[%s0 + $0x18] sm:$0xff]
    %v92 = vld [vmem:[%s1] sm:$0xff]
    %v93 = vld [vmem:[%s1 + $0x8] sm:$0xff]
    %v94 = vld [vmem:[%s1 + $0x10] sm:$0xff]
    %v95 = vld [vmem:[%s1 + $0x18] sm:$0xff]
    %v96 = vld [vmem:[%s1 + $0x20] sm:$0xff]
    %v97 = vld [vmem:[%s1 + $0x28] sm:$0xff]
    %v98 = vld [vmem:[%s1 + $0x30] sm:$0xff]
    %v99 = vld [vmem:[%s1 + $0x38] sm:$0xff]
    %v100 = vld [vmem:[%s2] sm:$0x1]
    %v102 = vperm.slane %v100, 0
    %vm104 = vcmask 523264
    %v106 = vsel %vm104, %v88, 0
    %v109 = vsel %vm104, %v89, 0
    %v112 = vsel %vm104, %v90, 0
    %v115 = vsel %vm104, %v91, 0
    %117 = vmatpush.msra.mxu0 0.0
    %118 = vmatpush.msra.mxu0 0.0
    %119 = vmatpush.msra.mxu0 0.0
    %120 = vmatpush.msra.mxu0 0.0
    %121 = vmatpush.msra.mxu0 0.0
    %122 = vmatpush.msra.mxu0 0.0
    %123 = vmatpush.msra.mxu0 0.0
    %124 = vmatpush.msra.mxu0 0.0
    %125 = vmatpush.msra.mxu0 %v99
    %126 = vmatpush.msra.mxu0 %v98
    %127 = vmatpush.msra.mxu0 %v97
    %128 = vmatpush.msra.mxu0 %v96
    %129 = vmatpush.msra.mxu0 %v95
    %130 = vmatpush.msra.mxu0 %v94
    %131 = vmatpush.msra.mxu0 %v93
    %132 = vmatpush.msra.mxu0 %v92
    %133 = vmatmul.f32.gmra.mxu0 %v106
    %v134 = vpop.f32.mrf.mxu0
    %v135 = vadd.f32 %v102, %v134
    %136 = vmatmul.f32.gmra.mxu0 %v109
    %v137 = vpop.f32.mrf.mxu0
    %v138 = vadd.f32 %v102, %v137
    %139 = vmatmul.f32.gmra.mxu0 %v112
    %v140 = vpop.f32.mrf.mxu0
    %v141 = vadd.f32 %v102, %v140
    %142 = vmatmul.f32.gmra.mxu0 %v115
    %v143 = vpop.f32.mrf.mxu0
    %v144 = vadd.f32 %v102, %v143
    %145 = vdwg.mxu0
    %v146 = vld [vmem:[%s3] sm:$0xff]
    %vm147 = vcmask 261120
    %v149 = vsel %vm147, %v146, 0
    %151 = vmatpush.msra.mxu0 0.0
    %152 = vmatpush.msra.mxu0 0.0
    %153 = vmatpush.msra.mxu0 0.0
    %154 = vmatpush.msra.mxu0 0.0
    %155 = vmatpush.msra.mxu0 0.0
    %156 = vmatpush.msra.mxu0 0.0
    %157 = vmatpush.msra.mxu0 0.0
    %158 = vmatpush.msra.mxu0 0.0
    %159 = vmatpush.msra.mxu0 0.0
    %160 = vmatpush.msra.mxu0 0.0
    %161 = vmatpush.msra.mxu0 0.0
    %162 = vmatpush.msra.mxu0 0.0
    %163 = vmatpush.msra.mxu0 %v144
    %164 = vmatpush.msra.mxu0 %v141
    %165 = vmatpush.msra.mxu0 %v138
    %166 = vmatpush.msra.mxu0 %v135
    %167 = vmatmul.f32.gmra.mxu0 %v149
    %v168 = vpop.f32.mrf.mxu0
    %v169 = vadd.f32 0.0, %v168
    %170 = vdwg.mxu0
    %v171 = vld [vmem:[%s4] sm:$0xff]
    %v172 = vld [vmem:[%s4 + $0x8] sm:$0xff]
    %v173 = vld [vmem:[%s4 + $0x10] sm:$0xff]
    %v174 = vld [vmem:[%s4 + $0x18] sm:$0xff]
    %vm175 = vcmask 31744
    %v177 = vsel %vm175, %v171, 0
    %v180 = vsel %vm175, %v172, 0
    %v183 = vsel %vm175, %v173, 0
    %v186 = vsel %vm175, %v174, 0
    %vm188 = vcmask 1043456
    %v190 = vsel %vm188, %v169, 0
    %192 = vmatpush.msra.mxu0 0.0
    %193 = vmatpush.msra.mxu0 0.0
    %194 = vmatpush.msra.mxu0 0.0
    %195 = vmatpush.msra.mxu0 0.0
    %196 = vmatpush.msra.mxu0 0.0
    %197 = vmatpush.msra.mxu0 0.0
    %198 = vmatpush.msra.mxu0 0.0
    %199 = vmatpush.msra.mxu0 0.0
    %200 = vmatpush.msra.mxu0 0.0
    %201 = vmatpush.msra.mxu0 0.0
    %202 = vmatpush.msra.mxu0 0.0
    %203 = vmatpush.msra.mxu0 0.0
    %204 = vmatpush.msra.mxu0 0.0
    %205 = vmatpush.msra.mxu0 0.0
    %206 = vmatpush.msra.mxu0 0.0
    %207 = vmatpush.msra.mxu0 %v190
    %208 = vmatmul.f32.gmra.mxu0 %v177
    %v209 = vpop.f32.mrf.mxu0
    %v210 = vadd.f32 0.0, %v209
    %211 = vmatmul.f32.gmra.mxu0 %v180
    %v212 = vpop.f32.mrf.mxu0
    %v213 = vadd.f32 0.0, %v212
    %214 = vmatmul.f32.gmra.mxu0 %v183
    %v215 = vpop.f32.mrf.mxu0
    %v216 = vadd.f32 0.0, %v215
    %217 = vmatmul.f32.gmra.mxu0 %v186
    %v218 = vpop.f32.mrf.mxu0
    %v219 = vadd.f32 0.0, %v218
    %220 = vdwg.mxu0
    %v221 = vadd.f32 %v135, %v210
    %v222 = vadd.f32 %v138, %v213
    %v223 = vadd.f32 %v141, %v216
    %v224 = vadd.f32 %v144, %v219
    %v225 = vmul.f32 %v221, 0.5
    %v226 = vmul.f32 %v222, 0.5
    %v227 = vmul.f32 %v223, 0.5
    %v228 = vmul.f32 %v224, 0.5
    %v229 = vld [vmem:[%s9] sm:$0xff]
    %v230 = vld [vmem:[%s9 + $0x8] sm:$0xff]
    %v231 = vlaneseq
    %v232 = vand.u32 %v231, 127
    %233 = vset.pattern.permute.xlu0 0
    %234 = vperm.xlu0 %233, %v229
    %v235 = vpop.permute.xlu0 %234
    %236 = vset.pattern.permute.xlu0 0
    %237 = vperm.xlu0 %236, %v230
    %v238 = vpop.permute.xlu0 %237
    %vm239 = vcmp.eq.s32.totalorder %v232, %v235
    %vm240 = vcmp.eq.s32.totalorder %v232, %v238
    %v241 = vsel %vm239, 1, 0
    %v242 = vsel %vm240, 1, 0
    %v243 = vcvt.s32.f32 %v241
    %v244 = vcvt.s32.f32 %v242
    %v245 = vld [vmem:[#allocation2] sm:$0xff]
    %v246 = vld [vmem:[#allocation2 + $0x8] sm:$0xff]
    %v247 = vld [vmem:[#allocation2 + $0x10] sm:$0xff]
    %v248 = vld [vmem:[#allocation2 + $0x18] sm:$0xff]
    %v250 = vsel %vm147, %v243, 0
    %v253 = vsel %vm147, %v244, 0
    %255 = vmatpush.msra.mxu0 0.0
    %256 = vmatpush.msra.mxu0 0.0
    %257 = vmatpush.msra.mxu0 0.0
    %258 = vmatpush.msra.mxu0 0.0
    %259 = vmatpush.msra.mxu0 0.0
    %260 = vmatpush.msra.mxu0 0.0
    %261 = vmatpush.msra.mxu0 0.0
    %262 = vmatpush.msra.mxu0 0.0
    %263 = vmatpush.msra.mxu0 0.0
    %264 = vmatpush.msra.mxu0 0.0
    %265 = vmatpush.msra.mxu0 0.0
    %266 = vmatpush.msra.mxu0 0.0
    %267 = vmatpush.msra.mxu0 %v248
    %268 = vmatpush.msra.mxu0 %v247
    %269 = vmatpush.msra.mxu0 %v246
    %270 = vmatpush.msra.mxu0 %v245
    %271 = vmatmul.f32.gmra.mxu0 %v250
    %v272 = vpop.f32.mrf.mxu0
    %v273 = vadd.f32 0.0, %v272
    %274 = vmatmul.f32.gmra.mxu0 %v253
    %v275 = vpop.f32.mrf.mxu0
    %v276 = vadd.f32 0.0, %v275
    %277 = vdwg.mxu0
    %vm278 = vcmp.gt.f32.partialorder %v273, 0.0
    %vm279 = vcmp.gt.f32.partialorder %v276, 0.0
    %280 = vmatpush.msra.mxu0 0.0
    %281 = vmatpush.msra.mxu0 0.0
    %282 = vmatpush.msra.mxu0 0.0
    %283 = vmatpush.msra.mxu0 0.0
    %284 = vmatpush.msra.mxu0 0.0
    %285 = vmatpush.msra.mxu0 0.0
    %286 = vmatpush.msra.mxu0 0.0
    %287 = vmatpush.msra.mxu0 0.0
    %288 = vmatpush.msra.mxu0 0.0
    %289 = vmatpush.msra.mxu0 0.0
    %290 = vmatpush.msra.mxu0 0.0
    %291 = vmatpush.msra.mxu0 0.0
    %292 = vmatpush.msra.mxu0 %v228
    %293 = vmatpush.msra.mxu0 %v227
    %294 = vmatpush.msra.mxu0 %v226
    %295 = vmatpush.msra.mxu0 %v225
    %296 = vmatmul.f32.gmra.mxu0 %v250
    %v297 = vpop.f32.mrf.mxu0
    %v298 = vadd.f32 0.0, %v297
    %299 = vmatmul.f32.gmra.mxu0 %v253
    %v300 = vpop.f32.mrf.mxu0
    %v301 = vadd.f32 0.0, %v300
    %302 = vdwg.mxu0
    %v303 = vld [vmem:[%s6] sm:$0x1]
    %304 = vmatpush.xpose.msra.mxu0 0.0
    %305 = vmatpush.xpose.msra.mxu0 0.0
    %306 = vmatpush.xpose.msra.mxu0 0.0
    %307 = vmatpush.xpose.msra.mxu0 0.0
    %308 = vmatpush.xpose.msra.mxu0 0.0
    %309 = vmatpush.xpose.msra.mxu0 0.0
    %310 = vmatpush.xpose.msra.mxu0 0.0
    %311 = vmatpush.xpose.msra.mxu0 0.0
    %312 = vmatpush.xpose.msra.mxu0 0.0
    %313 = vmatpush.xpose.msra.mxu0 0.0
    %314 = vmatpush.xpose.msra.mxu0 0.0
    %315 = vmatpush.xpose.msra.mxu0 0.0
    %316 = vmatpush.xpose.msra.mxu0 %v228
    %317 = vmatpush.xpose.msra.mxu0 %v227
    %318 = vmatpush.xpose.msra.mxu0 %v226
    %319 = vmatpush.xpose.msra.mxu0 %v225
    %320 = vmatmul.f32.gmra.mxu0 %v303
    %v321 = vpop.f32.mrf.mxu0
    %v322 = vadd.f32 0.0, %v321
    %323 = vdwg.mxu0
    %v324 = vperm.slane %v322, 0
    %v325 = vsel %vm278, %v324, -1e+30
    %v326 = vsel %vm279, %v324, -1e+30
    %v327 = vsel %vm147, %v325, -inf
    %328 = vmax.xlane.f32.xlu0 %v327
    %v329 = vpop.xlane.xlu0 %328
    %v330 = vsel %vm147, %v326, -inf
    %331 = vmax.xlane.f32.xlu0 %v330
    %v332 = vpop.xlane.xlu0 %331
    %v333 = vsub.f32 %v325, %v329
    %v334 = vsub.f32 %v326, %v332
    %v335 = vmul.f32 %v333, 1.442695
    %v336 = vpow.pop %v335
    %v337 = vmul.f32 %v334, 1.442695
    %v338 = vpow.pop %v337
    %v339 = vsel %vm278, %v336, 0.0
    %v340 = vsel %vm279, %v338, 0.0
    %v341 = vsel %vm147, %v339, 0.0
    %342 = vadd.xlane.f32.xlu0 %v341
    %v343 = vpop.xlane.xlu0 %342
    %v344 = vsel %vm147, %v340, 0.0
    %345 = vadd.xlane.f32.xlu0 %v344
    %v346 = vpop.xlane.xlu0 %345
    %v347 = vmax.f32 %v343, 1e-30
    %v348 = vmax.f32 %v346, 1e-30
    %v349 = vrcp.pop %v347
    %v350 = vmul.f32 %v347, %v349
    %v351 = vsub.f32 1.0, %v350
    %v352 = vmul.f32 %v349, %v351
    %v353 = vadd.f32 %v349, %v352
    %vm354 = vweird.f32 %v347
    %vm355 = vweird.f32 %v349
    %vm356 = vmor %vm354, %vm355
    %v357 = vsel %vm356, %v349, %v353
    %v358 = vand.u32 2147483647, %v347
    %vm359 = vcmp.eq.f32.partialorder %v358, 8.507059e+37
    %v360 = vand.u32 %v347, 2147483648
    %v361 = vor.u32 1.1754944e-38, %v360
    %v362 = vsel %vm359, %v361, %v357
    %v363 = vrcp.pop %v348
    %v364 = vmul.f32 %v348, %v363
    %v365 = vsub.f32 1.0, %v364
    %v366 = vmul.f32 %v363, %v365
    %v367 = vadd.f32 %v363, %v366
    %vm368 = vweird.f32 %v348
    %vm369 = vweird.f32 %v363
    %vm370 = vmor %vm368, %vm369
    %v371 = vsel %vm370, %v363, %v367
    %v372 = vand.u32 2147483647, %v348
    %vm373 = vcmp.eq.f32.partialorder %v372, 8.507059e+37
    %v374 = vand.u32 %v348, 2147483648
    %v375 = vor.u32 1.1754944e-38, %v374
    %v376 = vsel %vm373, %v375, %v371
    %v377 = vmul.f32 %v339, %v362
    %v378 = vmul.f32 %v340, %v376
    %v380 = vsel %vm147, %v377, 0
    %v383 = vsel %vm147, %v378, 0
    %385 = vmatpush.msra.mxu0 0.0
    %386 = vmatpush.msra.mxu0 0.0
    %387 = vmatpush.msra.mxu0 0.0
    %388 = vmatpush.msra.mxu0 0.0
    %389 = vmatpush.msra.mxu0 0.0
    %390 = vmatpush.msra.mxu0 0.0
    %391 = vmatpush.msra.mxu0 0.0
    %392 = vmatpush.msra.mxu0 0.0
    %393 = vmatpush.msra.mxu0 0.0
    %394 = vmatpush.msra.mxu0 0.0
    %395 = vmatpush.msra.mxu0 0.0
    %396 = vmatpush.msra.mxu0 0.0
    %397 = vmatpush.msra.mxu0 %v228
    %398 = vmatpush.msra.mxu0 %v227
    %399 = vmatpush.msra.mxu0 %v226
    %400 = vmatpush.msra.mxu0 %v225
    %401 = vmatmul.f32.gmra.mxu0 %v380
    %v402 = vpop.f32.mrf.mxu0
    %v403 = vadd.f32 0.0, %v402
    %404 = vmatmul.f32.gmra.mxu0 %v383
    %v405 = vpop.f32.mrf.mxu0
    %v406 = vadd.f32 0.0, %v405
    %407 = vdwg.mxu0
    %v408 = vld [vmem:[#allocation4] sm:$0xff]
    %v409 = vld [vmem:[#allocation4 + $0x8] sm:$0xff]
    %v410 = vld [vmem:[#allocation4 + $0x10] sm:$0xff]
    %v411 = vld [vmem:[#allocation4 + $0x18] sm:$0xff]
    %v412 = vld [vmem:[#allocation4 + $0x20] sm:$0xff]
    %v413 = vld [vmem:[#allocation4 + $0x28] sm:$0xff]
    %v414 = vld [vmem:[#allocation4 + $0x30] sm:$0xff]
    %v415 = vld [vmem:[#allocation4 + $0x38] sm:$0xff]
    %v416 = vld [vmem:[#allocation4 + $0x40] sm:$0xff]
    %v417 = vld [vmem:[#allocation4 + $0x48] sm:$0xff]
    %v418 = vld [vmem:[#allocation4 + $0x50] sm:$0xff]
    %v419 = vld [vmem:[#allocation4 + $0x58] sm:$0xff]
    %v420 = vld [vmem:[#allocation4 + $0x60] sm:$0xff]
    %v421 = vld [vmem:[#allocation4 + $0x68] sm:$0xff]
    %v422 = vld [vmem:[#allocation4 + $0x70] sm:$0xff]
    %v423 = vld [vmem:[#allocation4 + $0x78] sm:$0xff]
    %v424 = vld [vmem:[#allocation4 + $0x80] sm:$0xff]
    %v425 = vld [vmem:[#allocation4 + $0x88] sm:$0xff]
    %v426 = vld [vmem:[#allocation4 + $0x90] sm:$0xff]
    %v427 = vld [vmem:[#allocation4 + $0x98] sm:$0xff]
    %v428 = vld [vmem:[#allocation4 + $0xa0] sm:$0xff]
    %v429 = vld [vmem:[#allocation4 + $0xa8] sm:$0xff]
    %v430 = vld [vmem:[#allocation4 + $0xb0] sm:$0xff]
    %v431 = vld [vmem:[#allocation4 + $0xb8] sm:$0xff]
    %v432 = vld [vmem:[#allocation4 + $0xc0] sm:$0xff]
    %v433 = vld [vmem:[#allocation4 + $0xc8] sm:$0xff]
    %v434 = vld [vmem:[#allocation4 + $0xd0] sm:$0xff]
    %v435 = vld [vmem:[#allocation4 + $0xd8] sm:$0xff]
    %v436 = vld [vmem:[#allocation4 + $0xe0] sm:$0xff]
    %v437 = vld [vmem:[#allocation4 + $0xe8] sm:$0xff]
    %v438 = vld [vmem:[#allocation4 + $0xf0] sm:$0xff]
    %v439 = vld [vmem:[#allocation4 + $0xf8] sm:$0xff]
    %440 = vmatpush.msra.mxu0 %v439
    %441 = vmatpush.msra.mxu0 %v438
    %442 = vmatpush.msra.mxu0 %v437
    %443 = vmatpush.msra.mxu0 %v436
    %444 = vmatpush.msra.mxu0 %v435
    %445 = vmatpush.msra.mxu0 %v434
    %446 = vmatpush.msra.mxu0 %v433
    %447 = vmatpush.msra.mxu0 %v432
    %448 = vmatpush.msra.mxu0 %v431
    %449 = vmatpush.msra.mxu0 %v430
    %450 = vmatpush.msra.mxu0 %v429
    %451 = vmatpush.msra.mxu0 %v428
    %452 = vmatpush.msra.mxu0 %v427
    %453 = vmatpush.msra.mxu0 %v426
    %454 = vmatpush.msra.mxu0 %v425
    %455 = vmatpush.msra.mxu0 %v424
    %456 = vmatmul.f32.gmra.mxu0 %v403
    %v457 = vpop.f32.mrf.mxu0
    %v458 = vadd.f32 0.0, %v457
    %459 = vmatmul.f32.gmra.mxu0 %v406
    %v460 = vpop.f32.mrf.mxu0
    %v461 = vadd.f32 0.0, %v460
    %462 = vdwg.mxu0
    %463 = vmatpush.msra.mxu0 %v423
    %464 = vmatpush.msra.mxu0 %v422
    %465 = vmatpush.msra.mxu0 %v421
    %466 = vmatpush.msra.mxu0 %v420
    %467 = vmatpush.msra.mxu0 %v419
    %468 = vmatpush.msra.mxu0 %v418
    %469 = vmatpush.msra.mxu0 %v417
    %470 = vmatpush.msra.mxu0 %v416
    %471 = vmatpush.msra.mxu0 %v415
    %472 = vmatpush.msra.mxu0 %v414
    %473 = vmatpush.msra.mxu0 %v413
    %474 = vmatpush.msra.mxu0 %v412
    %475 = vmatpush.msra.mxu0 %v411
    %476 = vmatpush.msra.mxu0 %v410
    %477 = vmatpush.msra.mxu0 %v409
    %478 = vmatpush.msra.mxu0 %v408
    %479 = vmatmul.f32.gmra.mxu0 %v298
    %v480 = vpop.f32.mrf.mxu0
    %v481 = vadd.f32 %v458, %v480
    %482 = vmatmul.f32.gmra.mxu0 %v301
    %v483 = vpop.f32.mrf.mxu0
    %v484 = vadd.f32 %v461, %v483
    %485 = vdwg.mxu0
    %v486 = vtanh.pop %v481
    %v487 = vtanh.pop %v484
    %v488 = vld [vmem:[%s10] sm:$0xff]
    %v489 = vld [vmem:[%s10 + $0x8] sm:$0xff]
    %v490 = vld [vmem:[%s10 + $0x10] sm:$0xff]
    %v491 = vld [vmem:[%s10 + $0x18] sm:$0xff]
    %v492 = vld [vmem:[%s11] sm:$0xff]
    %v493 = vld [vmem:[%s11 + $0x8] sm:$0xff]
    %v494 = vld [vmem:[%s11 + $0x10] sm:$0xff]
    %v495 = vld [vmem:[%s11 + $0x18] sm:$0xff]
    %496 = vset.pattern.permute.xlu0 0
    %497 = vperm.xlu0 %496, %v488
    %v498 = vpop.permute.xlu0 %497
    %499 = vset.pattern.permute.xlu0 0
    %500 = vperm.xlu0 %499, %v489
    %v501 = vpop.permute.xlu0 %500
    %502 = vset.pattern.permute.xlu0 0
    %503 = vperm.xlu0 %502, %v490
    %v504 = vpop.permute.xlu0 %503
    %505 = vset.pattern.permute.xlu0 0
    %506 = vperm.xlu0 %505, %v491
    %v507 = vpop.permute.xlu0 %506
    %vm508 = vcmp.eq.s32.totalorder %v232, %v498
    %vm509 = vcmp.eq.s32.totalorder %v232, %v501
    %vm510 = vcmp.eq.s32.totalorder %v232, %v504
    %vm511 = vcmp.eq.s32.totalorder %v232, %v507
    %v512 = vsel %vm508, 1, 0
    %v513 = vsel %vm509, 1, 0
    %v514 = vsel %vm510, 1, 0
    %v515 = vsel %vm511, 1, 0
    %v516 = vcvt.s32.f32 %v512
    %v517 = vcvt.s32.f32 %v513
    %v518 = vcvt.s32.f32 %v514
    %v519 = vcvt.s32.f32 %v515
    %520 = vset.pattern.permute.xlu0 0
    %521 = vperm.xlu0 %520, %v492
    %v522 = vpop.permute.xlu0 %521
    %523 = vset.pattern.permute.xlu0 0
    %524 = vperm.xlu0 %523, %v493
    %v525 = vpop.permute.xlu0 %524
    %526 = vset.pattern.permute.xlu0 0
    %527 = vperm.xlu0 %526, %v494
    %v528 = vpop.permute.xlu0 %527
    %529 = vset.pattern.permute.xlu0 0
    %530 = vperm.xlu0 %529, %v495
    %v531 = vpop.permute.xlu0 %530
    %vm532 = vcmp.eq.s32.totalorder %v232, %v522
    %vm533 = vcmp.eq.s32.totalorder %v232, %v525
    %vm534 = vcmp.eq.s32.totalorder %v232, %v528
    %vm535 = vcmp.eq.s32.totalorder %v232, %v531
    %v536 = vsel %vm532, 1, 0
    %v537 = vsel %vm533, 1, 0
    %v538 = vsel %vm534, 1, 0
    %v539 = vsel %vm535, 1, 0
    %v540 = vcvt.s32.f32 %v536
    %v541 = vcvt.s32.f32 %v537
    %v542 = vcvt.s32.f32 %v538
    %v543 = vcvt.s32.f32 %v539
    %vm544 = vcmask 64512
    %v546 = vsel %vm544, %v516, 0
    %v549 = vsel %vm544, %v517, 0
    %v552 = vsel %vm544, %v518, 0
    %v555 = vsel %vm544, %v519, 0
    %557 = vmatpush.msra.mxu0 0.0
    %558 = vmatpush.msra.mxu0 0.0
    %559 = vmatpush.msra.mxu0 0.0
    %560 = vmatpush.msra.mxu0 0.0
    %561 = vmatpush.msra.mxu0 0.0
    %562 = vmatpush.msra.mxu0 0.0
    %563 = vmatpush.msra.mxu0 0.0
    %564 = vmatpush.msra.mxu0 0.0
    %565 = vmatpush.msra.mxu0 0.0
    %566 = vmatpush.msra.mxu0 0.0
    %567 = vmatpush.msra.mxu0 0.0
    %568 = vmatpush.msra.mxu0 0.0
    %569 = vmatpush.msra.mxu0 0.0
    %570 = vmatpush.msra.mxu0 0.0
    %571 = vmatpush.msra.mxu0 0.0
    %572 = vmatpush.msra.mxu0 %v169
    %573 = vmatmul.f32.gmra.mxu0 %v546
    %v574 = vpop.f32.mrf.mxu0
    %v575 = vadd.f32 0.0, %v574
    %576 = vmatmul.f32.gmra.mxu0 %v549
    %v577 = vpop.f32.mrf.mxu0
    %v578 = vadd.f32 0.0, %v577
    %579 = vmatmul.f32.gmra.mxu0 %v552
    %v580 = vpop.f32.mrf.mxu0
    %v581 = vadd.f32 0.0, %v580
    %582 = vmatmul.f32.gmra.mxu0 %v555
    %v583 = vpop.f32.mrf.mxu0
    %v584 = vadd.f32 0.0, %v583
    %585 = vdwg.mxu0
    %v587 = vsel %vm544, %v540, 0
    %v590 = vsel %vm544, %v541, 0
    %v593 = vsel %vm544, %v542, 0
    %v596 = vsel %vm544, %v543, 0
    %598 = vmatpush.msra.mxu0 0.0
    %599 = vmatpush.msra.mxu0 0.0
    %600 = vmatpush.msra.mxu0 0.0
    %601 = vmatpush.msra.mxu0 0.0
    %602 = vmatpush.msra.mxu0 0.0
    %603 = vmatpush.msra.mxu0 0.0
    %604 = vmatpush.msra.mxu0 0.0
    %605 = vmatpush.msra.mxu0 0.0
    %606 = vmatpush.msra.mxu0 0.0
    %607 = vmatpush.msra.mxu0 0.0
    %608 = vmatpush.msra.mxu0 0.0
    %609 = vmatpush.msra.mxu0 0.0
    %610 = vmatpush.msra.mxu0 0.0
    %611 = vmatpush.msra.mxu0 0.0
    %612 = vmatpush.msra.mxu0 0.0
    %613 = vmatpush.msra.mxu0 %v169
    %614 = vmatmul.f32.gmra.mxu0 %v587
    %v615 = vpop.f32.mrf.mxu0
    %v616 = vadd.f32 0.0, %v615
    %617 = vmatmul.f32.gmra.mxu0 %v590
    %v618 = vpop.f32.mrf.mxu0
    %v619 = vadd.f32 0.0, %v618
    %620 = vmatmul.f32.gmra.mxu0 %v593
    %v621 = vpop.f32.mrf.mxu0
    %v622 = vadd.f32 0.0, %v621
    %623 = vmatmul.f32.gmra.mxu0 %v596
    %v624 = vpop.f32.mrf.mxu0
    %v625 = vadd.f32 0.0, %v624
    %626 = vdwg.mxu0
    %v627 = vld [vmem:[#allocation6] sm:$0xff]
    %v628 = vld [vmem:[#allocation6 + $0x8] sm:$0xff]
    %v629 = vld [vmem:[#allocation6 + $0x10] sm:$0xff]
    %v630 = vld [vmem:[#allocation6 + $0x18] sm:$0xff]
    %v631 = vld [vmem:[#allocation6 + $0x20] sm:$0xff]
    %v632 = vld [vmem:[#allocation6 + $0x28] sm:$0xff]
    %v633 = vld [vmem:[#allocation6 + $0x30] sm:$0xff]
    %v634 = vld [vmem:[#allocation6 + $0x38] sm:$0xff]
    %v635 = vld [vmem:[#allocation6 + $0x40] sm:$0xff]
    %v636 = vld [vmem:[#allocation6 + $0x48] sm:$0xff]
    %v637 = vld [vmem:[#allocation6 + $0x50] sm:$0xff]
    %v638 = vld [vmem:[#allocation6 + $0x58] sm:$0xff]
    %v639 = vld [vmem:[#allocation6 + $0x60] sm:$0xff]
    %v640 = vld [vmem:[#allocation6 + $0x68] sm:$0xff]
    %v641 = vld [vmem:[#allocation6 + $0x70] sm:$0xff]
    %v642 = vld [vmem:[#allocation6 + $0x78] sm:$0xff]
    %v643 = vld [vmem:[#allocation6 + $0x80] sm:$0xff]
    %v644 = vld [vmem:[#allocation6 + $0x88] sm:$0xff]
    %v645 = vld [vmem:[#allocation6 + $0x90] sm:$0xff]
    %v646 = vld [vmem:[#allocation6 + $0x98] sm:$0xff]
    %v647 = vld [vmem:[#allocation6 + $0xa0] sm:$0xff]
    %v648 = vld [vmem:[#allocation6 + $0xa8] sm:$0xff]
    %v649 = vld [vmem:[#allocation6 + $0xb0] sm:$0xff]
    %v650 = vld [vmem:[#allocation6 + $0xb8] sm:$0xff]
    %v651 = vld [vmem:[#allocation6 + $0xc0] sm:$0xff]
    %v652 = vld [vmem:[#allocation6 + $0xc8] sm:$0xff]
    %v653 = vld [vmem:[#allocation6 + $0xd0] sm:$0xff]
    %v654 = vld [vmem:[#allocation6 + $0xd8] sm:$0xff]
    %v655 = vld [vmem:[#allocation6 + $0xe0] sm:$0xff]
    %v656 = vld [vmem:[#allocation6 + $0xe8] sm:$0xff]
    %v657 = vld [vmem:[#allocation6 + $0xf0] sm:$0xff]
    %v658 = vld [vmem:[#allocation6 + $0xf8] sm:$0xff]
    %659 = vmatpush.msra.mxu0 %v658
    %660 = vmatpush.msra.mxu0 %v657
    %661 = vmatpush.msra.mxu0 %v656
    %662 = vmatpush.msra.mxu0 %v655
    %663 = vmatpush.msra.mxu0 %v654
    %664 = vmatpush.msra.mxu0 %v653
    %665 = vmatpush.msra.mxu0 %v652
    %666 = vmatpush.msra.mxu0 %v651
    %667 = vmatpush.msra.mxu0 %v650
    %668 = vmatpush.msra.mxu0 %v649
    %669 = vmatpush.msra.mxu0 %v648
    %670 = vmatpush.msra.mxu0 %v647
    %671 = vmatpush.msra.mxu0 %v646
    %672 = vmatpush.msra.mxu0 %v645
    %673 = vmatpush.msra.mxu0 %v644
    %674 = vmatpush.msra.mxu0 %v643
    %675 = vmatmul.f32.gmra.mxu0 %v616
    %v676 = vpop.f32.mrf.mxu0
    %v677 = vadd.f32 0.0, %v676
    %678 = vmatmul.f32.gmra.mxu0 %v619
    %v679 = vpop.f32.mrf.mxu0
    %v680 = vadd.f32 0.0, %v679
    %681 = vmatmul.f32.gmra.mxu0 %v622
    %v682 = vpop.f32.mrf.mxu0
    %v683 = vadd.f32 0.0, %v682
    %684 = vmatmul.f32.gmra.mxu0 %v625
    %v685 = vpop.f32.mrf.mxu0
    %v686 = vadd.f32 0.0, %v685
    %687 = vdwg.mxu0
    %688 = vmatpush.msra.mxu0 %v642
    %689 = vmatpush.msra.mxu0 %v641
    %690 = vmatpush.msra.mxu0 %v640
    %691 = vmatpush.msra.mxu0 %v639
    %692 = vmatpush.msra.mxu0 %v638
    %693 = vmatpush.msra.mxu0 %v637
    %694 = vmatpush.msra.mxu0 %v636
    %695 = vmatpush.msra.mxu0 %v635
    %696 = vmatpush.msra.mxu0 %v634
    %697 = vmatpush.msra.mxu0 %v633
    %698 = vmatpush.msra.mxu0 %v632
    %699 = vmatpush.msra.mxu0 %v631
    %700 = vmatpush.msra.mxu0 %v630
    %701 = vmatpush.msra.mxu0 %v629
    %702 = vmatpush.msra.mxu0 %v628
    %703 = vmatpush.msra.mxu0 %v627
    %704 = vmatmul.f32.gmra.mxu0 %v575
    %v705 = vpop.f32.mrf.mxu0
    %v706 = vadd.f32 %v677, %v705
    %707 = vmatmul.f32.gmra.mxu0 %v578
    %v708 = vpop.f32.mrf.mxu0
    %v709 = vadd.f32 %v680, %v708
    %710 = vmatmul.f32.gmra.mxu0 %v581
    %v711 = vpop.f32.mrf.mxu0
    %v712 = vadd.f32 %v683, %v711
    %713 = vmatmul.f32.gmra.mxu0 %v584
    %v714 = vpop.f32.mrf.mxu0
    %v715 = vadd.f32 %v686, %v714
    %716 = vdwg.mxu0
    %v717 = vxor.u32 %v706, 2147483648
    %v718 = vxor.u32 %v709, 2147483648
    %v719 = vxor.u32 %v712, 2147483648
    %v720 = vxor.u32 %v715, 2147483648
    %v721 = vmul.f32 %v717, 1.442695
    %v722 = vpow.pop %v721
    %v723 = vmul.f32 %v718, 1.442695
    %v724 = vpow.pop %v723
    %v725 = vmul.f32 %v719, 1.442695
    %v726 = vpow.pop %v725
    %v727 = vmul.f32 %v720, 1.442695
    %v728 = vpow.pop %v727
    %v729 = vadd.f32 %v722, 1.0
    %v730 = vadd.f32 %v724, 1.0
    %v731 = vadd.f32 %v726, 1.0
    %v732 = vadd.f32 %v728, 1.0
    %v733 = vrcp.pop %v729
    %v734 = vmul.f32 %v729, %v733
    %v735 = vsub.f32 1.0, %v734
    %v736 = vmul.f32 %v733, %v735
    %v737 = vadd.f32 %v733, %v736
    %vm738 = vweird.f32 %v729
    %vm739 = vweird.f32 %v733
    %vm740 = vmor %vm738, %vm739
    %v741 = vsel %vm740, %v733, %v737
    %v742 = vand.u32 2147483647, %v729
    %vm743 = vcmp.eq.f32.partialorder %v742, 8.507059e+37
    %v744 = vand.u32 %v729, 2147483648
    %v745 = vor.u32 1.1754944e-38, %v744
    %v746 = vsel %vm743, %v745, %v741
    %v747 = vmul.f32 1.0, %v746
    %v748 = vrcp.pop %v730
    %v749 = vmul.f32 %v730, %v748
    %v750 = vsub.f32 1.0, %v749
    %v751 = vmul.f32 %v748, %v750
    %v752 = vadd.f32 %v748, %v751
    %vm753 = vweird.f32 %v730
    %vm754 = vweird.f32 %v748
    %vm755 = vmor %vm753, %vm754
    %v756 = vsel %vm755, %v748, %v752
    %v757 = vand.u32 2147483647, %v730
    %vm758 = vcmp.eq.f32.partialorder %v757, 8.507059e+37
    %v759 = vand.u32 %v730, 2147483648
    %v760 = vor.u32 1.1754944e-38, %v759
    %v761 = vsel %vm758, %v760, %v756
    %v762 = vmul.f32 1.0, %v761
    %v763 = vrcp.pop %v731
    %v764 = vmul.f32 %v731, %v763
    %v765 = vsub.f32 1.0, %v764
    %v766 = vmul.f32 %v763, %v765
    %v767 = vadd.f32 %v763, %v766
    %vm768 = vweird.f32 %v731
    %vm769 = vweird.f32 %v763
    %vm770 = vmor %vm768, %vm769
    %v771 = vsel %vm770, %v763, %v767
    %v772 = vand.u32 2147483647, %v731
    %vm773 = vcmp.eq.f32.partialorder %v772, 8.507059e+37
    %v774 = vand.u32 %v731, 2147483648
    %v775 = vor.u32 1.1754944e-38, %v774
    %v776 = vsel %vm773, %v775, %v771
    %v777 = vmul.f32 1.0, %v776
    %v778 = vrcp.pop %v732
    %v779 = vmul.f32 %v732, %v778
    %v780 = vsub.f32 1.0, %v779
    %v781 = vmul.f32 %v778, %v780
    %v782 = vadd.f32 %v778, %v781
    %vm783 = vweird.f32 %v732
    %vm784 = vweird.f32 %v778
    %vm785 = vmor %vm783, %vm784
    %v786 = vsel %vm785, %v778, %v782
    %v787 = vand.u32 2147483647, %v732
    %vm788 = vcmp.eq.f32.partialorder %v787, 8.507059e+37
    %v789 = vand.u32 %v732, 2147483648
    %v790 = vor.u32 1.1754944e-38, %v789
    %v791 = vsel %vm788, %v790, %v786
    %v792 = vmul.f32 1.0, %v791
    %v793 = vmul.f32 %v747, %v486
    %v794 = vmul.f32 %v762, %v487
    %v795 = vmul.f32 %v777, %v486
    %v796 = vmul.f32 %v792, %v487
    %797 = vadd.xlane.f32.xlu0 %v793
    %v798 = vpop.xlane.xlu0 %797
    %799 = vadd.xlane.f32.xlu0 %v794
    %v800 = vpop.xlane.xlu0 %799
    %801 = vadd.xlane.f32.xlu0 %v795
    %v802 = vpop.xlane.xlu0 %801
    %803 = vadd.xlane.f32.xlu0 %v796
    %v804 = vpop.xlane.xlu0 %803
    %v805 = vmul.f32 %v747, %v747
    %v806 = vmul.f32 %v762, %v762
    %v807 = vmul.f32 %v777, %v777
    %v808 = vmul.f32 %v792, %v792
    %809 = vadd.xlane.f32.xlu0 %v805
    %v810 = vpop.xlane.xlu0 %809
    %811 = vadd.xlane.f32.xlu0 %v806
    %v812 = vpop.xlane.xlu0 %811
    %813 = vadd.xlane.f32.xlu0 %v807
    %v814 = vpop.xlane.xlu0 %813
    %815 = vadd.xlane.f32.xlu0 %v808
    %v816 = vpop.xlane.xlu0 %815
    %v817 = vmul.f32 %v486, %v486
    %v818 = vmul.f32 %v487, %v487
    %819 = vadd.xlane.f32.xlu0 %v817
    %v820 = vpop.xlane.xlu0 %819
    %821 = vadd.xlane.f32.xlu0 %v818
    %v822 = vpop.xlane.xlu0 %821
    %v823 = vmul.f32 %v810, %v820
    %v824 = vmul.f32 %v812, %v822
    %v825 = vmul.f32 %v814, %v820
    %v826 = vmul.f32 %v816, %v822
    %v827 = vmax.f32 %v823, 1e-16
    %v828 = vmax.f32 %v824, 1e-16
    %v829 = vmax.f32 %v825, 1e-16
    %v830 = vmax.f32 %v826, 1e-16
    %v831 = vrsqrt.pop %v827
    %v832 = vmul.f32 %v831, %v827
    %v833 = vmul.f32 %v832, %v831
    %v834 = vmul.f32 0.5, %v833
    %v835 = vsub.f32 1.5, %v834
    %v836 = vmul.f32 %v831, %v835
    %vm837 = vweird.f32 %v827
    %vm838 = vweird.f32 %v831
    %vm839 = vmor %vm837, %vm838
    %v840 = vsel %vm839, %v831, %v836
    %v841 = vrsqrt.pop %v828
    %v842 = vmul.f32 %v841, %v828
    %v843 = vmul.f32 %v842, %v841
    %v844 = vmul.f32 0.5, %v843
    %v845 = vsub.f32 1.5, %v844
    %v846 = vmul.f32 %v841, %v845
    %vm847 = vweird.f32 %v828
    %vm848 = vweird.f32 %v841
    %vm849 = vmor %vm847, %vm848
    %v850 = vsel %vm849, %v841, %v846
    %v851 = vrsqrt.pop %v829
    %v852 = vmul.f32 %v851, %v829
    %v853 = vmul.f32 %v852, %v851
    %v854 = vmul.f32 0.5, %v853
    %v855 = vsub.f32 1.5, %v854
    %v856 = vmul.f32 %v851, %v855
    %vm857 = vweird.f32 %v829
    %vm858 = vweird.f32 %v851
    %vm859 = vmor %vm857, %vm858
    %v860 = vsel %vm859, %v851, %v856
    %v861 = vrsqrt.pop %v830
    %v862 = vmul.f32 %v861, %v830
    %v863 = vmul.f32 %v862, %v861
    %v864 = vmul.f32 0.5, %v863
    %v865 = vsub.f32 1.5, %v864
    %v866 = vmul.f32 %v861, %v865
    %vm867 = vweird.f32 %v830
    %vm868 = vweird.f32 %v861
    %vm869 = vmor %vm867, %vm868
    %v870 = vsel %vm869, %v861, %v866
    %v871 = vmul.f32 %v798, %v840
    %v872 = vmul.f32 %v800, %v850
    %v873 = vmul.f32 %v802, %v860
    %v874 = vmul.f32 %v804, %v870
    %vm875 = vcmask 7168
    %876 = vst.msk [vmem:[%s12] sm:$0xff] %vm875, %v871
    %877 = vst.msk [vmem:[%s12 + $0x8] sm:$0xff] %vm875, %v872
    %878 = vst.msk [vmem:[%s12 + $0x10] sm:$0xff] %vm875, %v873
    %879 = vst.msk [vmem:[%s12 + $0x18] sm:$0xff] %vm875, %v874
    // Predicated region
    $region62: #{iead_forward.1} parent=1 // pred_check
      _
    $region63: #{iead_forward.1} parent=1 // pred_check_branch
      %881 = sbr.rel (0) target = $region65
    $region64: #{iead_forward.1} parent=1 // pred_region
      _
    $region65: #{iead_forward.1} parent=1 // pred_fallthru
      _
    // Predicated region
    $region66: #{iead_forward.1} parent=1 // pred_check
      _
    $region67: #{iead_forward.1} parent=1 // pred_check_branch
      %883 = sbr.rel (0) target = $region69
    $region68: #{iead_forward.1} parent=1 // pred_region
      _
    $region69: #{iead_forward.1} parent=1 // pred_fallthru
      _
    %884 = vsyncpa [#allocation3], 1
    %885 = vsyncpa [#allocation5], 1

</llo_original>
